<compile_context>
chip_gen: v7x
topology: tpu7x:2x2x1
jax: 0.10.0
libtpu: 0.0.40
codegen_flags: <defaults>
</compile_context>

<pallas_src>
import functools

import jax
import jax.numpy as jnp
import numpy as np
from jax import lax
from jax.experimental import pallas as pl
from jax.experimental.pallas import tpu as pltpu


def _round_up(x, m):
    return -(-x // m) * m


def _dice_sums_kernel(pred_ref, true_ref, inter_ref, st_ref,
                      inter_acc, st_acc, *,
                      spatial, tile_s, lane_chunk, tiles_per_split,
                      can_be_partial):
    """Accumulate per-row sum(p*t) and sum(p+t) over spatial tiles."""
    s = pl.program_id(0)
    k = pl.program_id(2)
    nk = pl.num_programs(2)

    @pl.when(k == 0)
    def _init():
        inter_acc[...] = jnp.zeros_like(inter_acc)
        st_acc[...] = jnp.zeros_like(st_acc)

    global_blk = s * tiles_per_split + k
    n_chunks = tile_s // lane_chunk

    def _accumulate(masked):
        def chunk_body(j, carry):
            i_part, s_part = carry
            off = pl.multiple_of(j * lane_chunk, 128)
            p = pred_ref[:, pl.ds(off, lane_chunk)].astype(jnp.float32)
            t = true_ref[:, pl.ds(off, lane_chunk)].astype(jnp.float32)
            if masked:
                # Mask BEFORE any arithmetic so padded garbage cannot
                # propagate into the sums.
                col = (lax.broadcasted_iota(jnp.int32, p.shape, 1)
                       + (global_blk * tile_s + off))
                keep = col < spatial
                p = jnp.where(keep, p, 0.0)
                t = jnp.where(keep, t, 0.0)
            pt = p * t
            st = p + t
            # Fold lane_chunk lanes down to 128 with pure VPU adds
            # (static 128-lane slices are vreg selections, no XLU).
            for m in range(lane_chunk // 128):
                sl = slice(m * 128, (m + 1) * 128)
                i_part = i_part + pt[:, sl]
                s_part = s_part + st[:, sl]
            return i_part, s_part

        i_fin, s_fin = lax.fori_loop(
            0, n_chunks, chunk_body, (inter_acc[...], st_acc[...]),
            unroll=(n_chunks <= 8))
        inter_acc[...] = i_fin
        st_acc[...] = s_fin

    if can_be_partial:
        is_full = (global_blk + 1) * tile_s <= spatial

        @pl.when(is_full)
        def _steady():
            _accumulate(masked=False)

        @pl.when(jnp.logical_not(is_full))
        def _tail():
            _accumulate(masked=True)
    else:
        _accumulate(masked=False)

    @pl.when(k == nk - 1)
    def _finalize():
        # Single cross-lane reduce per (split, row-block), outside steady state.
        inter_ref[...] = jnp.sum(inter_acc[...], axis=-1, keepdims=True)[None]
        st_ref[...] = jnp.sum(st_acc[...], axis=-1, keepdims=True)[None]


def _pick_row_block(rows):
    if rows % 8 != 0:
        return rows  # full row extent is exempt from the /8 rule
    best = 8
    d = 16
    while d <= min(64, rows):
        if rows % d == 0:
            best = d
        d += 8
    return best


def _vmem_limit_bytes():
    try:
        cap = int(pltpu.get_tpu_info().vmem_capacity_bytes)
    except Exception:
        cap = 64 * 1024 * 1024  # conservative (v7x physical)
    # v5e/v6e (128 MiB physical) -> 64 MiB scoped; v7x (64 MiB) -> 32 MiB.
    return min(64 * 1024 * 1024, max(16 * 1024 * 1024, cap // 2))


def _pick_tiles(spatial, row_block, itemsize, vmem_limit, spatial_tile):
    """Pick (tile_s, lane_chunk) with lane_chunk | tile_s, both multiples of 128."""
    spatial_128 = _round_up(spatial, 128)
    padded_rows = _round_up(row_block, 8)
    # Lane chunk sized so 4 live f32 arrays (p, t, p*t, p+t) stay in vregs.
    desired_chunk = max(128, (8192 // padded_rows // 128) * 128)

    if spatial_tile is not None:
        max_tile = max(128, (int(spatial_tile) // 128) * 128)
    else:
        budget = (vmem_limit * 3) // 4              # input double-buffers only
        max_tile = budget // (4 * padded_rows * itemsize)   # 2 inputs x 2 bufs
        max_tile = max(128, (max_tile // 128) * 128)

    if max_tile >= spatial_128:
        tile_s = spatial_128
        lane_chunk = 128
        c = 128
        while c <= min(desired_chunk, tile_s):
            if tile_s % c == 0:
                lane_chunk = c
            c += 128
    else:
        lane_chunk = min(desired_chunk, max_tile)
        tile_s = (max_tile // lane_chunk) * lane_chunk
    return tile_s, lane_chunk


def combo_loss_wbce_ndice(pred, true, weight, alpha=0.5, smooth=1e-6,
                          spatial_tile=None):
    """Pallas implementation of ComboLoss_wbce_ndice.forward (Dice-only)."""
    del alpha  # unused by the reference forward()
    # TODO(synk): BCELoss_with_weight is built in __init__ but never used by
    # forward(), so it is intentionally not implemented here.
    B, C = pred.shape[0], pred.shape[1]
    assert C == len(weight), "shape is not mapping"
    spatial = int(np.prod(pred.shape[2:]))
    rows = B * C

    p2 = pred.reshape(rows, spatial)
    t2 = true.reshape(rows, spatial)
    itemsize = p2.dtype.itemsize

    row_block = _pick_row_block(rows)
    num_row_blocks = rows // row_block
    vmem_limit = _vmem_limit_bytes()
    tile_s, lane_chunk = _pick_tiles(spatial, row_block, itemsize, vmem_limit,
                                     spatial_tile)

    tiles_total = pl.cdiv(spatial, tile_s)
    # If the row axis gives no parallelism, split the spatial sweep in two so
    # both v7x TensorCores get work (same total grid steps on 1-TC chips).
    n_splits = 2 if (num_row_blocks == 1 and tiles_total >= 2) else 1
    tiles_per_split = pl.cdiv(tiles_total, n_splits)
    covered = n_splits * tiles_per_split * tile_s
    can_be_partial = covered != spatial

    if n_splits * tiles_per_split > tiles_total:
        # Padding tiles exist: clamp the block index (the kernel fully masks
        # those tiles, so the duplicated read contributes exactly zero).
        def in_index(si, r, k):
            return (r, jnp.minimum(si * tiles_per_split + k, tiles_total - 1))
    else:
        def in_index(si, r, k):
            return (r, si * tiles_per_split + k)

    grid = (n_splits, num_row_blocks, tiles_per_split)

    kernel = functools.partial(
        _dice_sums_kernel, spatial=spatial, tile_s=tile_s,
        lane_chunk=lane_chunk, tiles_per_split=tiles_per_split,
        can_be_partial=can_be_partial)

    cost = pl.CostEstimate(
        flops=4 * rows * spatial,
        transcendentals=0,
        bytes_accessed=2 * rows * spatial * itemsize + 8 * n_splits * rows)

    inter_parts, st_parts = pl.pallas_call(
        kernel,
        out_shape=(jax.ShapeDtypeStruct((n_splits, rows, 1), jnp.float32),
                   jax.ShapeDtypeStruct((n_splits, rows, 1), jnp.float32)),
        grid_spec=pltpu.PrefetchScalarGridSpec(
            num_scalar_prefetch=0,
            grid=grid,
            in_specs=[
                pl.BlockSpec((row_block, tile_s), in_index),
                pl.BlockSpec((row_block, tile_s), in_index),
            ],
            out_specs=(
                pl.BlockSpec((1, row_block, 1), lambda si, r, k: (si, r, 0)),
                pl.BlockSpec((1, row_block, 1), lambda si, r, k: (si, r, 0)),
            ),
            scratch_shapes=[
                pltpu.VMEM((row_block, 128), jnp.float32),  # running sum(p*t)
                pltpu.VMEM((row_block, 128), jnp.float32),  # running sum(p+t)
            ],
        ),
        compiler_params=pltpu.CompilerParams(
            dimension_semantics=("parallel", "parallel", "arbitrary"),
            vmem_limit_bytes=vmem_limit),
        cost_estimate=cost,
    )(p2, t2)

    # Tiny combine + divide + weighted sum over B*C values — done in XLA.
    inter = jnp.sum(inter_parts[:, :, 0], axis=0)          # (rows,)
    st = jnp.sum(st_parts[:, :, 0], axis=0)                # (rows,)
    sm = jnp.float32(smooth)
    dice = 1.0 - (2.0 * inter + sm) / (st + sm)

    w = jnp.asarray(np.asarray(weight, dtype=np.float32))
    w_rows = jnp.tile(w / jnp.sum(w), (B,)) / jnp.float32(B)
    return jnp.sum(w_rows * dice)


def _reference_dice_loss(pred, true, weight, smooth=1e-6):
    """Pure-JAX reference matching the PyTorch loop semantics."""
    B, C = pred.shape[0], pred.shape[1]
    w = np.asarray(weight, dtype=float)
    loss = 0.0
    for b in range(B):
        for c in range(C):
            p = pred[b, c].astype(jnp.float32)
            t = true[b, c].astype(jnp.float32)
            inter = jnp.sum(p * t)
            loss += (w[c] / w.sum()) * (
                1.0 - (2.0 * inter + smooth) / (jnp.sum(p) + jnp.sum(t) + smooth)
            )
    return loss / B


def _check(pred, true, weight, rtol=1e-5, atol=1e-5, **kw):
    got = jax.block_until_ready(combo_loss_wbce_ndice(pred, true, weight, **kw))
    ref = jax.block_until_ready(
        _reference_dice_loss(pred.astype(jnp.float32),
                             true.astype(jnp.float32), weight))
    np.testing.assert_allclose(np.asarray(got), np.asarray(ref),
                               rtol=rtol, atol=atol)


if __name__ == "__main__":
    key = jax.random.PRNGKey(0)
    weight4 = [1.0, 2.0, 3.0, 4.0]

    # 1) Base case: B=2, C=4, 16x16 — single tile, single row block, no split.
    k1, k2, key = jax.random.split(key, 3)
    pred = jax.nn.sigmoid(jax.random.normal(k1, (2, 4, 16, 16), jnp.float32))
    true = (jax.random.uniform(k2, (2, 4, 16, 16), jnp.float32) > 0.5).astype(
        jnp.float32)
    _check(pred, true, weight4)

    # 2) Same data, forced multi-tile path -> 2-way spatial split (even tiles).
    _check(pred, true, weight4, spatial_tile=128)

    # 3) Non-multiple-of-128 spatial extent (18x18 = 324) -> masked last tile.
    k1, k2, key = jax.random.split(key, 3)
    pred3 = jax.nn.sigmoid(jax.random.normal(k1, (2, 4, 18, 18), jnp.float32))
    true3 = (jax.random.uniform(k2, (2, 4, 18, 18), jnp.float32) > 0.5).astype(
        jnp.float32)
    _check(pred3, true3, weight4)

    # 4) 18x18 with tile=128: odd tile count -> clamped index map + a fully
    #    masked padding tile on the second split.
    _check(pred3, true3, weight4, spatial_tile=128)

    # 5) rows=16 (B=4): larger row block, forced split + multi-tile.
    k1, k2, key = jax.random.split(key, 3)
    pred5 = jax.nn.sigmoid(jax.random.normal(k1, (4, 4, 16, 16), jnp.float32))
    true5 = (jax.random.uniform(k2, (4, 4, 16, 16), jnp.float32) > 0.5).astype(
        jnp.float32)
    _check(pred5, true5, weight4, spatial_tile=128)

    # 6) bf16 streaming path (halves HBM bytes); math is still f32 in-kernel.
    _check(pred.astype(jnp.bfloat16), true.astype(jnp.bfloat16), weight4,
           rtol=1e-4, atol=1e-4)

    print("KERNEL_OK")
</pallas_src>

<mosaic_0001>
module attributes {stable_mosaic.version = 11 : i64} {
  func.func @_dice_sums_kernel(%arg0: i32, %arg1: i32, %arg2: i32, %arg3: memref<8x256xf32, #tpu.memory_space<vmem>>, %arg4: memref<8x256xf32, #tpu.memory_space<vmem>>, %arg5: memref<1x8x1xf32, #tpu.memory_space<vmem>>, %arg6: memref<1x8x1xf32, #tpu.memory_space<vmem>>, %arg7: memref<8x128xf32, #tpu.memory_space<vmem>>, %arg8: memref<8x128xf32, #tpu.memory_space<vmem>>) attributes {dimension_semantics = [#tpu.dimension_semantics<parallel>, #tpu.dimension_semantics<parallel>, #tpu.dimension_semantics<arbitrary>], iteration_bounds = array<i64: 1, 1, 1>, scalar_prefetch = 0 : i64, scratch_operands = 2 : i64, tpu.core_type = #tpu.core_type<tc>, window_params = [{transform_indices = @transform_0, window_bounds = array<i64: 8, 256>}, {transform_indices = @transform_1, window_bounds = array<i64: 8, 256>}, {transform_indices = @transform_2, window_bounds = array<i64: 1, 8, 1>}, {transform_indices = @transform_3, window_bounds = array<i64: 1, 8, 1>}]} {
    %c0_i32 = arith.constant 0 : i32
    %0 = arith.cmpi eq, %arg2, %c0_i32 : i32
    %1 = arith.extui %0 : i1 to i32
    %c0_i32_0 = arith.constant 0 : i32
    %2 = arith.cmpi ne, %1, %c0_i32_0 : i32
    scf.if %2 {
      %cst = arith.constant 0.000000e+00 : f32
      %26 = vector.broadcast %cst : f32 to vector<8x128xf32>
      %c0_13 = arith.constant 0 : index
      %c0_14 = arith.constant 0 : index
      %27 = vector.load %arg7[%c0_13, %c0_14] : memref<8x128xf32, #tpu.memory_space<vmem>>, vector<8x128xf32>
      tpu.vector_store %arg7[%c0_13, %c0_14], %26 {strides = array<i32>} : memref<8x128xf32, #tpu.memory_space<vmem>>, vector<8x128xf32>,
      %cst_15 = arith.constant 0.000000e+00 : f32
      %28 = vector.broadcast %cst_15 : f32 to vector<8x128xf32>
      %c0_16 = arith.constant 0 : index
      %c0_17 = arith.constant 0 : index
      %29 = vector.load %arg8[%c0_16, %c0_17] : memref<8x128xf32, #tpu.memory_space<vmem>>, vector<8x128xf32>
      tpu.vector_store %arg8[%c0_16, %c0_17], %28 {strides = array<i32>} : memref<8x128xf32, #tpu.memory_space<vmem>>, vector<8x128xf32>,
    } else {
    }
    %c0 = arith.constant 0 : index
    %c0_1 = arith.constant 0 : index
    %3 = vector.load %arg7[%c0, %c0_1] : memref<8x128xf32, #tpu.memory_space<vmem>>, vector<8x128xf32>
    %c0_2 = arith.constant 0 : index
    %c0_3 = arith.constant 0 : index
    %4 = vector.load %arg8[%c0_2, %c0_3] : memref<8x128xf32, #tpu.memory_space<vmem>>, vector<8x128xf32>
    %c0_i32_4 = arith.constant 0 : i32
    %c256_i32 = arith.constant 256 : i32
    %5 = arith.muli %c0_i32_4, %c256_i32 : i32
    %6 = tpu.assume_multiple %5, 128 : i32
    %c0_5 = arith.constant 0 : index
    %7 = arith.index_cast %6 : i32 to index
    %8 = vector.load %arg3[%c0_5, %7] : memref<8x256xf32, #tpu.memory_space<vmem>>, vector<8x256xf32>
    %c0_6 = arith.constant 0 : index
    %9 = arith.index_cast %6 : i32 to index
    %10 = vector.load %arg4[%c0_6, %9] : memref<8x256xf32, #tpu.memory_space<vmem>>, vector<8x256xf32>
    %11 = arith.mulf %8, %10 : vector<8x256xf32>
    %12 = arith.addf %8, %10 : vector<8x256xf32>
    %13 = vector.extract_strided_slice %11 {offsets = [0, 0], sizes = [8, 128], strides = [1, 1]} : vector<8x256xf32> to vector<8x128xf32>
    %14 = arith.addf %3, %13 : vector<8x128xf32>
    %15 = vector.extract_strided_slice %12 {offsets = [0, 0], sizes = [8, 128], strides = [1, 1]} : vector<8x256xf32> to vector<8x128xf32>
    %16 = arith.addf %4, %15 : vector<8x128xf32>
    %17 = vector.extract_strided_slice %11 {offsets = [0, 128], sizes = [8, 128], strides = [1, 1]} : vector<8x256xf32> to vector<8x128xf32>
    %18 = arith.addf %14, %17 : vector<8x128xf32>
    %19 = vector.extract_strided_slice %12 {offsets = [0, 128], sizes = [8, 128], strides = [1, 1]} : vector<8x256xf32> to vector<8x128xf32>
    %20 = arith.addf %16, %19 : vector<8x128xf32>
    %c1_i32 = arith.constant 1 : i32
    %c0_7 = arith.constant 0 : index
    %c0_8 = arith.constant 0 : index
    %21 = vector.load %arg7[%c0_7, %c0_8] : memref<8x128xf32, #tpu.memory_space<vmem>>, vector<8x128xf32>
    tpu.vector_store %arg7[%c0_7, %c0_8], %18 {strides = array<i32>} : memref<8x128xf32, #tpu.memory_space<vmem>>, vector<8x128xf32>,
    %c0_9 = arith.constant 0 : index
    %c0_10 = arith.constant 0 : index
    %22 = vector.load %arg8[%c0_9, %c0_10] : memref<8x128xf32, #tpu.memory_space<vmem>>, vector<8x128xf32>
    tpu.vector_store %arg8[%c0_9, %c0_10], %20 {strides = array<i32>} : memref<8x128xf32, #tpu.memory_space<vmem>>, vector<8x128xf32>,
    %c0_i32_11 = arith.constant 0 : i32
    %23 = arith.cmpi eq, %arg2, %c0_i32_11 : i32
    %24 = arith.extui %23 : i1 to i32
    %c0_i32_12 = arith.constant 0 : i32
    %25 = arith.cmpi ne, %24, %c0_i32_12 : i32
    scf.if %25 {
      %c0_13 = arith.constant 0 : index
      %c0_14 = arith.constant 0 : index
      %26 = vector.load %arg7[%c0_13, %c0_14] : memref<8x128xf32, #tpu.memory_space<vmem>>, vector<8x128xf32>
      %cst = arith.constant dense<0.000000e+00> : vector<8xf32>
      %27 = vector.multi_reduction <add>, %26, %cst [1] : vector<8x128xf32> to vector<8xf32>
      %28 = vector.shape_cast %27 : vector<8xf32> to vector<8x1xf32>
      %29 = vector.shape_cast %28 : vector<8x1xf32> to vector<1x8x1xf32>
      %c0_15 = arith.constant 0 : index
      %c0_16 = arith.constant 0 : index
      %c0_17 = arith.constant 0 : index
      %30 = vector.load %arg5[%c0_15, %c0_16, %c0_17] : memref<1x8x1xf32, #tpu.memory_space<vmem>>, vector<1x8x1xf32>
      tpu.vector_store %arg5[%c0_15, %c0_16, %c0_17], %29 {strides = array<i32>} : memref<1x8x1xf32, #tpu.memory_space<vmem>>, vector<1x8x1xf32>,
      %c0_18 = arith.constant 0 : index
      %c0_19 = arith.constant 0 : index
      %31 = vector.load %arg8[%c0_18, %c0_19] : memref<8x128xf32, #tpu.memory_space<vmem>>, vector<8x128xf32>
      %cst_20 = arith.constant dense<0.000000e+00> : vector<8xf32>
      %32 = vector.multi_reduction <add>, %31, %cst_20 [1] : vector<8x128xf32> to vector<8xf32>
      %33 = vector.shape_cast %32 : vector<8xf32> to vector<8x1xf32>
      %34 = vector.shape_cast %33 : vector<8x1xf32> to vector<1x8x1xf32>
      %c0_21 = arith.constant 0 : index
      %c0_22 = arith.constant 0 : index
      %c0_23 = arith.constant 0 : index
      %35 = vector.load %arg6[%c0_21, %c0_22, %c0_23] : memref<1x8x1xf32, #tpu.memory_space<vmem>>, vector<1x8x1xf32>
      tpu.vector_store %arg6[%c0_21, %c0_22, %c0_23], %34 {strides = array<i32>} : memref<1x8x1xf32, #tpu.memory_space<vmem>>, vector<1x8x1xf32>,
    } else {
    }
    return
  }
  func.func @transform_0(%arg0: i32, %arg1: i32, %arg2: i32) -> (i32, i32) {
    %c1_i32 = arith.constant 1 : i32
    %0 = arith.muli %arg0, %c1_i32 : i32
    %1 = arith.addi %0, %arg2 : i32
    %c0_i32 = arith.constant 0 : i32
    return %arg1, %1 : i32, i32
  }
  func.func @transform_1(%arg0: i32, %arg1: i32, %arg2: i32) -> (i32, i32) {
    %c1_i32 = arith.constant 1 : i32
    %0 = arith.muli %arg0, %c1_i32 : i32
    %1 = arith.addi %0, %arg2 : i32
    %c0_i32 = arith.constant 0 : i32
    return %arg1, %1 : i32, i32
  }
  func.func @transform_2(%arg0: i32, %arg1: i32, %arg2: i32) -> (i32, i32, i32) {
    %c0_i32 = arith.constant 0 : i32
    %c0_i32_0 = arith.constant 0 : i32
    return %arg0, %arg1, %c0_i32 : i32, i32, i32
  }
  func.func @transform_3(%arg0: i32, %arg1: i32, %arg2: i32) -> (i32, i32, i32) {
    %c0_i32 = arith.constant 0 : i32
    %c0_i32_0 = arith.constant 0 : i32
    return %arg0, %arg1, %c0_i32 : i32, i32, i32
  }
}

</mosaic_0001>

<llo_original>
// kernel: tpu_custom_call.1
$region0: #{tpu_custom_call.1}
  #allocation0 [shape = 'u32[]', space=smem, size = 0x4, offset = 0x4, fixed_abs, tag = 'smem constant byte address 0x4 - core index']
  #allocation1 [shape = 'u32[144,128]{1,0:T(1,128)}', space=vmem, size = 0x12000, scoped, tag = 'internal scratch']
  #allocation2 [shape = 'f32[8,128]{1,0:T(8,128)}', space=vmem, size = 0x1000, scoped, tag = 'scratch operand']
  #allocation3 [shape = 'f32[8,128]{1,0:T(8,128)}', space=vmem, size = 0x1000, scoped, tag = 'scratch operand']
  %s0 = inlined_call_operand.hbm [shape: f32[8,256], index: 0, kind: input, shape index: {}]
  %s1 = inlined_call_operand.hbm [shape: f32[8,256], index: 1, kind: input, shape index: {}]
  %s2 = inlined_call_operand.vmem [shape: f32[1,8,1], index: 2, kind: output, shape index: {0}]
  %s3 = inlined_call_operand.vmem [shape: f32[1,8,1], index: 3, kind: output, shape index: {1}]
  %4 = xla_tuple %s2, %s3
  %s5 = sld [smem:[#allocation0]]
  $region42: #{tpu_custom_call.1} parent=0
    _
  %s7 = ssub.s32 1, %s5
  %s8 = scalar_select 0, %s7, %s5
  $region1: #{tpu_custom_call.1} parent=0
    #allocation4 [shape = 'u8[8192]{0}', space=vmem, size = 0x2000, scoped, tag = 'input window, operand 0, single buffered']
    #allocation5 [shape = 's32[1]{0}', space=sflag, size = 0x4, scoped, tag = 'scoped memory for tpu_custom_call.1']
    #allocation6 [shape = 'u8[8192]{0}', space=vmem, size = 0x2000, scoped, tag = 'input window, operand 1, single buffered']
    #allocation7 [shape = 's32[1]{0}', space=sflag, size = 0x4, scoped, tag = 'scoped memory for tpu_custom_call.1']
    %9 = vsyncpa [#allocation5], 0
    %10 = vsyncpa [#allocation7], 0
    // Predicated region
    $region2: #{tpu_custom_call.1} parent=1 // pred_check
      _
    $region3: #{tpu_custom_call.1} parent=1 // pred_check_branch
      %12 = sbr.rel (0) target = $region5
    $region4: #{tpu_custom_call.1} parent=1 // pred_region
      %s13 = sadd.s32 0, 0
      %s14 = smul.u32 2, %s13
      %s16 = ssub.s32 256, 256
      %17 = vsyncadd [#allocation5], %s16
      %s18 = smul.addr %s14, 128
      %s19 = scalar_lea.hbm %s0, %s18
      %s21 = sshll.u32 [#allocation4], 4
      %s22 = int_to_ptr.vmem [resolvable:$true] %s21
      %24 = dma.hbm_to_vmem [thread:$0]  %s19, 256, %s22, [#allocation5]
    $region5: #{tpu_custom_call.1} parent=1 // pred_fallthru
      _
    // Predicated region
    $region6: #{tpu_custom_call.1} parent=1 // pred_check
      _
    $region7: #{tpu_custom_call.1} parent=1 // pred_check_branch
      %26 = sbr.rel (0) target = $region9
    $region8: #{tpu_custom_call.1} parent=1 // pred_region
      %s27 = sadd.s32 0, 0
      %s28 = smul.u32 2, %s27
      %s30 = ssub.s32 256, 256
      %31 = vsyncadd [#allocation7], %s30
      %s32 = smul.addr %s28, 128
      %s33 = scalar_lea.hbm %s1, %s32
      %s35 = sshll.u32 [#allocation6], 4
      %s36 = int_to_ptr.vmem [resolvable:$true] %s35
      %38 = dma.hbm_to_vmem [thread:$0]  %s33, 256, %s36, [#allocation7]
    $region9: #{tpu_custom_call.1} parent=1 // pred_fallthru
      _
    // Predicated region
    $region10: #{tpu_custom_call.1} parent=1 // pred_check
      _
    $region11: #{tpu_custom_call.1} parent=1 // pred_check_branch
      %40 = sbr.rel (0) target = $region13
    $region12: #{tpu_custom_call.1} parent=1 // pred_region
      %41 = dma.done [#allocation5], 256
    $region13: #{tpu_custom_call.1} parent=1 // pred_fallthru
      _
    // Predicated region
    $region14: #{tpu_custom_call.1} parent=1 // pred_check
      _
    $region15: #{tpu_custom_call.1} parent=1 // pred_check_branch
      %43 = sbr.rel (0) target = $region17
    $region16: #{tpu_custom_call.1} parent=1 // pred_region
      %44 = dma.done [#allocation7], 256
    $region17: #{tpu_custom_call.1} parent=1 // pred_fallthru
      _
    %s45 = sadd.s32 0, 0
    %s46 = smul.u32 2, %s45
    %s47 = sadd.s32 0, 0
    %s48 = smul.u32 2, %s47
    %p49 = scmp.eq.s32.totalorder 0, 0
    // Predicated region
    $region18: #{tpu_custom_call.1} parent=1 // pred_check
      %p50 = pneg %p49
    $region19: #{tpu_custom_call.1} parent=1 // pred_check_branch
      %52 = sbr.rel (%p50) target = $region21
    $region20: #{tpu_custom_call.1} parent=1 // pred_region
      %53 = vst [vmem:[#allocation2] sm:$0xff] 0.0
      %54 = vst [vmem:[#allocation3] sm:$0xff] 0.0
    $region21: #{tpu_custom_call.1} parent=1 // pred_fallthru
      _
    %v55 = vld [vmem:[#allocation2] sm:$0xff]
    %v56 = vld [vmem:[#allocation3] sm:$0xff]
    %v57 = vld [vmem:[#allocation4] sm:$0xff]
    %v58 = vld [vmem:[#allocation4 + $0x8] sm:$0xff]
    %v59 = vld [vmem:[#allocation6] sm:$0xff]
    %v60 = vld [vmem:[#allocation6 + $0x8] sm:$0xff]
    %v61 = vmul.f32 %v57, %v59
    %v62 = vmul.f32 %v58, %v60
    %v63 = vadd.f32 %v57, %v59
    %v64 = vadd.f32 %v58, %v60
    %v65 = vadd.f32 %v55, %v61
    %v66 = vadd.f32 %v56, %v63
    %v67 = vadd.f32 %v65, %v62
    %v68 = vadd.f32 %v66, %v64
    %69 = vst [vmem:[#allocation2] sm:$0xff] %v67
    %70 = vst [vmem:[#allocation3] sm:$0xff] %v68
    // Predicated region
    $region22: #{tpu_custom_call.1} parent=1 // pred_check
      %p71 = pneg %p49
    $region23: #{tpu_custom_call.1} parent=1 // pred_check_branch
      %73 = sbr.rel (%p71) target = $region25
    $region24: #{tpu_custom_call.1} parent=1 // pred_region
      %v74 = vld [vmem:[#allocation2] sm:$0xff]
      %75 = vadd.xlane.f32.xlu0 %v74
      %v76 = vpop.xlane.xlu0 %75
      %vm77 = vcmask 7168
      %78 = vst.msk [vmem:[%s2] sm:$0xff] %vm77, %v76
      %v79 = vld [vmem:[#allocation3] sm:$0xff]
      %80 = vadd.xlane.f32.xlu0 %v79
      %v81 = vpop.xlane.xlu0 %80
      %82 = vst.msk [vmem:[%s3] sm:$0xff] %vm77, %v81
    $region25: #{tpu_custom_call.1} parent=1 // pred_fallthru
      _
    // Predicated region
    $region26: #{tpu_custom_call.1} parent=1 // pred_check
      _
    $region27: #{tpu_custom_call.1} parent=1 // pred_check_branch
      %84 = sbr.rel (0) target = $region29
    $region28: #{tpu_custom_call.1} parent=1 // pred_region
      _
    $region29: #{tpu_custom_call.1} parent=1 // pred_fallthru
      _
    // Predicated region
    $region30: #{tpu_custom_call.1} parent=1 // pred_check
      _
    $region31: #{tpu_custom_call.1} parent=1 // pred_check_branch
      %86 = sbr.rel (0) target = $region33
    $region32: #{tpu_custom_call.1} parent=1 // pred_region
      _
    $region33: #{tpu_custom_call.1} parent=1 // pred_fallthru
      _
    // Predicated region
    $region34: #{tpu_custom_call.1} parent=1 // pred_check
      _
    $region35: #{tpu_custom_call.1} parent=1 // pred_check_branch
      %88 = sbr.rel (0) target = $region37
    $region36: #{tpu_custom_call.1} parent=1 // pred_region
      _
    $region37: #{tpu_custom_call.1} parent=1 // pred_fallthru
      _
    // Predicated region
    $region38: #{tpu_custom_call.1} parent=1 // pred_check
      _
    $region39: #{tpu_custom_call.1} parent=1 // pred_check_branch
      %90 = sbr.rel (0) target = $region41
    $region40: #{tpu_custom_call.1} parent=1 // pred_region
      _
    $region41: #{tpu_custom_call.1} parent=1 // pred_fallthru
      _
    %91 = vsyncpa [#allocation5], 1
    %92 = vsyncpa [#allocation7], 1

</llo_original>
